<compile_context>
chip_gen: v7x
topology: tpu7x:2x2x1
jax: 0.10.0
libtpu: 0.0.40
codegen_flags: <defaults>
</compile_context>

<pallas_src>
import jax
import jax.numpy as jnp
from jax.experimental import pallas as pl
from jax.experimental.pallas import tpu as pltpu


def _compute_v1(x, w, b):
    """v1[b, r, n] = sum_c x[b, r, c] * w[n, c] + bias[n]  (VPU only)."""
    C = x.shape[-1]
    wt = jnp.transpose(w)                       # (C, N) — one in-kernel XLU transpose
    acc = x[:, :, 0:1] * wt[0:1, :][None]       # (B, R, 1) * (1, 1, N)
    for c in range(1, C):                       # unrolled K=2 rank-1 updates
        acc = acc + x[:, :, c:c + 1] * wt[c:c + 1, :][None]
    return acc + b[None]                        # (1, 1, N) bias broadcast


def fused_linear_permute_kernel(x_ref, w_ref, b_ref, out_ref):
    """3 inputs -> 1 packed output: out[0] = v1, out[1] = permute(v1, (0,2,1)).

    x_ref: (B, R, C), w_ref: (N, C), b_ref: (1, N), out_ref: (2, B, R, N)
    (packed form requires R == N, which the module's shapes satisfy).
    """
    v1 = _compute_v1(x_ref[...], w_ref[...], b_ref[...])
    out_ref[0] = v1                              # (B, R, N)
    out_ref[1] = jnp.transpose(v1, (0, 2, 1))    # per-batch transpose on XLU


def linear_kernel(x_ref, w_ref, b_ref, v1_ref):
    """Fallback (R != N): v1 only; the permute is done by XLA in the wrapper."""
    v1_ref[...] = _compute_v1(x_ref[...], w_ref[...], b_ref[...])


def model_forward(x1, weight, bias):
    """x1: (B, R, C) f32, weight: (N, C), bias: (N,). Returns (v1, v2)."""
    B, R, C = x1.shape
    N = weight.shape[0]
    b_row = bias.reshape(1, N)                   # free reshape, no copy
    vmem = pl.BlockSpec(memory_space=pltpu.MemorySpace.VMEM)

    if R == N:
        packed = pl.pallas_call(
            fused_linear_permute_kernel,
            out_shape=jax.ShapeDtypeStruct((2, B, R, N), jnp.float32),
            in_specs=[vmem, vmem, vmem],
            out_specs=vmem,
        )(x1, weight, b_row)
        v1 = packed[0]                           # (B, R, N)
        v2 = packed[1]                           # (B, N, R)
    else:
        # TODO(synk): non-square (R != N) case keeps the permute as one XLA op.
        v1 = pl.pallas_call(
            linear_kernel,
            out_shape=jax.ShapeDtypeStruct((B, R, N), jnp.float32),
            in_specs=[vmem, vmem, vmem],
            out_specs=vmem,
        )(x1, weight, b_row)
        v2 = jnp.transpose(v1, (0, 2, 1))
    return v1, v2


if __name__ == "__main__":
    key = jax.random.PRNGKey(0)
    k_x, k_w, k_b = jax.random.split(key, 3)

    # Shapes implied by the module: x1 (1, 2, 2), Linear(2, 2).
    x1 = jax.random.normal(k_x, (1, 2, 2), dtype=jnp.float32)
    bound = 1.0 / (2.0 ** 0.5)                   # torch.nn.Linear default init range
    weight = jax.random.uniform(k_w, (2, 2), jnp.float32, -bound, bound)
    bias = jax.random.uniform(k_b, (2,), jnp.float32, -bound, bound)

    fwd = jax.jit(model_forward)
    v1, v2 = fwd(x1, weight, bias)
    jax.block_until_ready((v1, v2))

    # Reference check in plain JAX.
    v1_ref = jnp.einsum("brc,nc->brn", x1, weight) + bias
    v2_ref = jnp.transpose(v1_ref, (0, 2, 1))
    assert jnp.allclose(v1, v1_ref, atol=1e-5), "v1 mismatch"
    assert jnp.allclose(v2, v2_ref, atol=1e-5), "v2 mismatch"

    print("KERNEL_OK")
</pallas_src>

<mosaic_0001>
module attributes {stable_mosaic.version = 11 : i64} {
  func.func @fused_linear_permute_kernel(%arg0: memref<1x2x2xf32, #tpu.memory_space<vmem>>, %arg1: memref<2x2xf32, #tpu.memory_space<vmem>>, %arg2: memref<1x2xf32, #tpu.memory_space<vmem>>, %arg3: memref<2x1x2x2xf32, #tpu.memory_space<vmem>>) attributes {dimension_semantics = [], scalar_prefetch = 0 : i64, scratch_operands = 0 : i64, tpu.core_type = #tpu.core_type<tc>} {
    %c0 = arith.constant 0 : index
    %c0_0 = arith.constant 0 : index
    %c0_1 = arith.constant 0 : index
    %0 = vector.load %arg0[%c0, %c0_0, %c0_1] : memref<1x2x2xf32, #tpu.memory_space<vmem>>, vector<1x2x2xf32>
    %c0_2 = arith.constant 0 : index
    %c0_3 = arith.constant 0 : index
    %1 = vector.load %arg1[%c0_2, %c0_3] : memref<2x2xf32, #tpu.memory_space<vmem>>, vector<2x2xf32>
    %c0_4 = arith.constant 0 : index
    %c0_5 = arith.constant 0 : index
    %2 = vector.load %arg2[%c0_4, %c0_5] : memref<1x2xf32, #tpu.memory_space<vmem>>, vector<1x2xf32>
    %3 = tpu.transpose %1, [1, 0] : vector<2x2xf32> -> vector<2x2xf32>
    %4 = vector.extract_strided_slice %0 {offsets = [0, 0, 0], sizes = [1, 2, 1], strides = [1, 1, 1]} : vector<1x2x2xf32> to vector<1x2x1xf32>
    %5 = vector.extract_strided_slice %3 {offsets = [0, 0], sizes = [1, 2], strides = [1, 1]} : vector<2x2xf32> to vector<1x2xf32>
    %6 = vector.shape_cast %5 : vector<1x2xf32> to vector<1x1x2xf32>
    %7 = vector.broadcast %4 : vector<1x2x1xf32> to vector<1x2x2xf32>
    %8 = vector.broadcast %6 : vector<1x1x2xf32> to vector<1x2x2xf32>
    %9 = arith.mulf %7, %8 : vector<1x2x2xf32>
    %10 = vector.extract_strided_slice %0 {offsets = [0, 0, 1], sizes = [1, 2, 1], strides = [1, 1, 1]} : vector<1x2x2xf32> to vector<1x2x1xf32>
    %11 = vector.extract_strided_slice %3 {offsets = [1, 0], sizes = [1, 2], strides = [1, 1]} : vector<2x2xf32> to vector<1x2xf32>
    %12 = vector.shape_cast %11 : vector<1x2xf32> to vector<1x1x2xf32>
    %13 = vector.broadcast %10 : vector<1x2x1xf32> to vector<1x2x2xf32>
    %14 = vector.broadcast %12 : vector<1x1x2xf32> to vector<1x2x2xf32>
    %15 = arith.mulf %13, %14 : vector<1x2x2xf32>
    %16 = arith.addf %9, %15 : vector<1x2x2xf32>
    %17 = vector.shape_cast %2 : vector<1x2xf32> to vector<1x1x2xf32>
    %18 = vector.broadcast %17 : vector<1x1x2xf32> to vector<1x2x2xf32>
    %19 = arith.addf %16, %18 : vector<1x2x2xf32>
    %c0_6 = arith.constant 0 : index
    %c0_7 = arith.constant 0 : index
    %c0_8 = arith.constant 0 : index
    %c0_9 = arith.constant 0 : index
    %20 = vector.load %arg3[%c0_6, %c0_7, %c0_8, %c0_9] : memref<2x1x2x2xf32, #tpu.memory_space<vmem>>, vector<1x1x2x2xf32>
    %21 = vector.shape_cast %20 : vector<1x1x2x2xf32> to vector<1x2x2xf32>
    %22 = vector.shape_cast %19 : vector<1x2x2xf32> to vector<1x1x2x2xf32>
    tpu.vector_store %arg3[%c0_6, %c0_7, %c0_8, %c0_9], %22 {strides = array<i32>} : memref<2x1x2x2xf32, #tpu.memory_space<vmem>>, vector<1x1x2x2xf32>,
    %23 = tpu.transpose %19, [0, 2, 1] : vector<1x2x2xf32> -> vector<1x2x2xf32>
    %c1 = arith.constant 1 : index
    %c0_10 = arith.constant 0 : index
    %c0_11 = arith.constant 0 : index
    %c0_12 = arith.constant 0 : index
    %24 = vector.load %arg3[%c1, %c0_10, %c0_11, %c0_12] : memref<2x1x2x2xf32, #tpu.memory_space<vmem>>, vector<1x1x2x2xf32>
    %25 = vector.shape_cast %24 : vector<1x1x2x2xf32> to vector<1x2x2xf32>
    %26 = vector.shape_cast %23 : vector<1x2x2xf32> to vector<1x1x2x2xf32>
    tpu.vector_store %arg3[%c1, %c0_10, %c0_11, %c0_12], %26 {strides = array<i32>} : memref<2x1x2x2xf32, #tpu.memory_space<vmem>>, vector<1x1x2x2xf32>,
    return
  }
}

</mosaic_0001>

<llo_original>
// kernel: model_forward.1
$region0: #{model_forward.1}
  #allocation0 [shape = 'u32[]', space=smem, size = 0x4, offset = 0x4, fixed_abs, tag = 'smem constant byte address 0x4 - core index']
  #allocation1 [shape = 'u32[144,128]{1,0:T(1,128)}', space=vmem, size = 0x12000, scoped, tag = 'internal scratch']
  %s0 = inlined_call_operand.vmem [shape: f32[1,2,2], index: 0, kind: input, shape index: {}]
  %s1 = inlined_call_operand.vmem [shape: f32[2,2], index: 1, kind: input, shape index: {}]
  %s2 = inlined_call_operand.vmem [shape: f32[1,2], index: 2, kind: input, shape index: {}]
  %s3 = inlined_call_operand.vmem [shape: f32[2,1,2,2], index: 3, kind: output, shape index: {}]
  %s4 = sld [smem:[#allocation0]]
  $region22: #{model_forward.1} parent=0
    _
  %s6 = ssub.s32 1, %s4
  %s7 = scalar_select 0, %s6, %s4
  // Predicated region
  $region2: #{model_forward.1} parent=0 // pred_check
    _
  $region3: #{model_forward.1} parent=0 // pred_check_branch
    %9 = sbr.rel (0) target = $region5
  $region4: #{model_forward.1} parent=0 // pred_region
    _
  $region5: #{model_forward.1} parent=0 // pred_fallthru
    _
  // Predicated region
  $region6: #{model_forward.1} parent=0 // pred_check
    _
  $region7: #{model_forward.1} parent=0 // pred_check_branch
    %11 = sbr.rel (0) target = $region9
  $region8: #{model_forward.1} parent=0 // pred_region
    _
  $region9: #{model_forward.1} parent=0 // pred_fallthru
    _
  // Predicated region
  $region10: #{model_forward.1} parent=0 // pred_check
    _
  $region11: #{model_forward.1} parent=0 // pred_check_branch
    %13 = sbr.rel (0) target = $region13
  $region12: #{model_forward.1} parent=0 // pred_region
    _
  $region13: #{model_forward.1} parent=0 // pred_fallthru
    _
  %v14 = vld [vmem:[%s0] sm:$0x3]
  %v15 = vld [vmem:[%s1] sm:$0x3]
  %v16 = vld [vmem:[%s2] sm:$0x1]
  %17 = vxpose.xlu0.b32.start [1/16] %v15, 128
  %18 = vxpose.xlu0.b32.cont [2/16] 0.0, 128
  %19 = vxpose.xlu0.b32.cont [3/16] 0.0, 128
  %20 = vxpose.xlu0.b32.cont [4/16] 0.0, 128
  %21 = vxpose.xlu0.b32.cont [5/16] 0.0, 128
  %22 = vxpose.xlu0.b32.cont [6/16] 0.0, 128
  %23 = vxpose.xlu0.b32.cont [7/16] 0.0, 128
  %24 = vxpose.xlu0.b32.cont [8/16] 0.0, 128
  %25 = vxpose.xlu0.b32.cont [9/16] 0.0, 128
  %26 = vxpose.xlu0.b32.cont [10/16] 0.0, 128
  %27 = vxpose.xlu0.b32.cont [11/16] 0.0, 128
  %28 = vxpose.xlu0.b32.cont [12/16] 0.0, 128
  %29 = vxpose.xlu0.b32.cont [13/16] 0.0, 128
  %30 = vxpose.xlu0.b32.cont [14/16] 0.0, 128
  %31 = vxpose.xlu0.b32.cont [15/16] 0.0, 128
  %32 = vxpose.xlu0.b32.end [16/16] 0.0, 128
  %v33 = vpop.trf.xlu0
  %v34 = vpop.trf.xlu0
  %v35 = vpop.trf.xlu0
  %v36 = vpop.trf.xlu0
  %v37 = vpop.trf.xlu0
  %v38 = vpop.trf.xlu0
  %v39 = vpop.trf.xlu0
  %v40 = vpop.trf.xlu0
  %v41 = vpop.trf.xlu0
  %v42 = vpop.trf.xlu0
  %v43 = vpop.trf.xlu0
  %v44 = vpop.trf.xlu0
  %v45 = vpop.trf.xlu0
  %v46 = vpop.trf.xlu0
  %v47 = vpop.trf.xlu0
  %v48 = vpop.trf.xlu0
  %50 = vset.pattern.permute.xlu0 0
  %51 = vperm.xlu0 %50, %v14
  %v52 = vpop.permute.xlu0 %51
  %v54 = vlaneseq
  %v55 = vshrl.u32 %v54, 7
  %v56 = vsub.s32 0, %v55
  %v57 = vrot.slane %v33, %v56
  %v58 = vmul.f32 %v52, %v57
  %59 = vset.pattern.permute.xlu0 1
  %60 = vperm.xlu0 %59, %v14
  %v61 = vpop.permute.xlu0 %60
  %v63 = vlaneseq
  %v64 = vshrl.u32 %v63, 7
  %v65 = vsub.s32 1, %v64
  %v66 = vrot.slane %v33, %v65
  %v67 = vmul.f32 %v61, %v66
  %v68 = vadd.f32 %v58, %v67
  %v70 = vlaneseq
  %v71 = vshrl.u32 %v70, 7
  %v72 = vsub.s32 0, %v71
  %v73 = vrot.slane %v16, %v72
  %v75 = vadd.f32 %v68, %v73
  %vm76 = vcmask 9216
  %77 = vst.msk [vmem:[%s3] sm:$0x3] %vm76, %v75
  %78 = vxpose.xlu0.b32.start [1/16] %v75, 128
  %79 = vxpose.xlu0.b32.cont [2/16] 0.0, 128
  %80 = vxpose.xlu0.b32.cont [3/16] 0.0, 128
  %81 = vxpose.xlu0.b32.cont [4/16] 0.0, 128
  %82 = vxpose.xlu0.b32.cont [5/16] 0.0, 128
  %83 = vxpose.xlu0.b32.cont [6/16] 0.0, 128
  %84 = vxpose.xlu0.b32.cont [7/16] 0.0, 128
  %85 = vxpose.xlu0.b32.cont [8/16] 0.0, 128
  %86 = vxpose.xlu0.b32.cont [9/16] 0.0, 128
  %87 = vxpose.xlu0.b32.cont [10/16] 0.0, 128
  %88 = vxpose.xlu0.b32.cont [11/16] 0.0, 128
  %89 = vxpose.xlu0.b32.cont [12/16] 0.0, 128
  %90 = vxpose.xlu0.b32.cont [13/16] 0.0, 128
  %91 = vxpose.xlu0.b32.cont [14/16] 0.0, 128
  %92 = vxpose.xlu0.b32.cont [15/16] 0.0, 128
  %93 = vxpose.xlu0.b32.end [16/16] 0.0, 128
  %v94 = vpop.trf.xlu0
  %v95 = vpop.trf.xlu0
  %v96 = vpop.trf.xlu0
  %v97 = vpop.trf.xlu0
  %v98 = vpop.trf.xlu0
  %v99 = vpop.trf.xlu0
  %v100 = vpop.trf.xlu0
  %v101 = vpop.trf.xlu0
  %v102 = vpop.trf.xlu0
  %v103 = vpop.trf.xlu0
  %v104 = vpop.trf.xlu0
  %v105 = vpop.trf.xlu0
  %v106 = vpop.trf.xlu0
  %v107 = vpop.trf.xlu0
  %v108 = vpop.trf.xlu0
  %v109 = vpop.trf.xlu0
  %s110 = scalar_lea.vmem %s3, 2
  %111 = vst.msk [vmem:[%s110] sm:$0x3] %vm76, %v94
  // Predicated region
  $region14: #{model_forward.1} parent=0 // pred_check
    _
  $region15: #{model_forward.1} parent=0 // pred_check_branch
    %113 = sbr.rel (0) target = $region17
  $region16: #{model_forward.1} parent=0 // pred_region
    _
  $region17: #{model_forward.1} parent=0 // pred_fallthru
    _
  // Predicated region
  $region18: #{model_forward.1} parent=0 // pred_check
    _
  $region19: #{model_forward.1} parent=0 // pred_check_branch
    %115 = sbr.rel (0) target = $region21
  $region20: #{model_forward.1} parent=0 // pred_region
    _
  $region21: #{model_forward.1} parent=0 // pred_fallthru
    _

</llo_original>
